<compile_context>
chip_gen: v6e
topology: v6e:2x2x1
jax: 0.10.0
libtpu: 0.0.40
codegen_flags: <defaults>
</compile_context>

<pallas_src>
import functools

import jax
import jax.numpy as jnp
from jax.experimental import pallas as pl
from jax.experimental.pallas import tpu as pltpu

_LANES = 128


def _diff_loss_kernel(x1_ref, x2_ref, out_ref, *, num_chunks):
    """Accumulate lane-partial s11/s22/s12 for one (B, td) feature tile."""
    @pl.when(pl.program_id(1) == 0)
    def _init():
        out_ref[...] = jnp.zeros_like(out_ref)

    b = x1_ref.shape[0]
    p11 = jnp.zeros((b, _LANES), jnp.float32)
    p22 = jnp.zeros((b, _LANES), jnp.float32)
    p12 = jnp.zeros((b, _LANES), jnp.float32)
    # Static 128-column chunks: f32 upcast + centering + products per chunk keeps
    # the f32 working set at a few (B,128) vreg sets regardless of tile width.
    for j in range(num_chunks):
        sl = slice(j * _LANES, (j + 1) * _LANES)
        v1 = x1_ref[:, sl].astype(jnp.float32)
        v2 = x2_ref[:, sl].astype(jnp.float32)
        v1 = v1 - jnp.mean(v1, axis=0, keepdims=True)  # exact: full batch per tile
        v2 = v2 - jnp.mean(v2, axis=0, keepdims=True)
        p11 = p11 + v1 * v1
        p22 = p22 + v2 * v2
        p12 = p12 + v1 * v2

    # Lane-dense accumulation into this core's resident output block; the single
    # cross-lane (XLU) reduction is deferred to the wrapper epilogue.
    out_ref[0] += p11
    out_ref[1] += p22
    out_ref[2] += p12


def _hw_config():
    """Return (vmem_limit_bytes, tile_budget_bytes, num_tensorcores) for this chip."""
    kind = ""
    try:
        kind = jax.devices()[0].device_kind.lower()
    except Exception:
        kind = ""
    cap = None
    try:
        cap = int(pltpu.get_tpu_info().vmem_capacity_bytes)
    except Exception:
        cap = None
    if cap is None:
        cap = 64 * 1024 * 1024 if "v7" in kind else 128 * 1024 * 1024
    vmem_limit = min(96 * 1024 * 1024, (3 * cap) // 4)   # ~96 MiB v5e/v6e, ~48 MiB v7x
    tile_budget = min(48 * 1024 * 1024, vmem_limit // 2)
    cores = 1
    for tag in ("v7", "v5p", "v4"):                      # dual-TC / megacore chips
        if tag in kind:
            cores = 2
            break
    return vmem_limit, tile_budget, cores


def diff_loss(x1, x2, *, vmem_tile_budget_bytes=None, num_cores=None):
    assert x1.shape == x2.shape and x1.ndim == 2, "expects matching 2-D inputs"
    B, D = x1.shape
    it1 = jnp.dtype(x1.dtype).itemsize
    it2 = jnp.dtype(x2.dtype).itemsize

    vmem_limit, auto_budget, auto_cores = _hw_config()
    tile_budget = auto_budget if vmem_tile_budget_bytes is None else int(vmem_tile_budget_bytes)
    nc = auto_cores if num_cores is None else int(num_cores)

    d128 = ((D + _LANES - 1) // _LANES) * _LANES

    # Double-buffered input windows per 128 feature columns, in the *stored* dtype
    # (the f32 upcast is chunked in-kernel and does not scale with td), plus a
    # reserve for in-kernel f32 temporaries / accumulators / the output block.
    bytes_per_128 = 2 * B * _LANES * (it1 + it2)
    reserve = 16 * B * _LANES * 4
    cap_chunks = max(1, (tile_budget - reserve) // bytes_per_128)
    cap_chunks = min(cap_chunks, 32)            # bound kernel unroll (td <= 4096 cols)
    td = int(min(d128, cap_chunks * _LANES))

    kt_total = -(-d128 // td)                   # feature tiles needed to cover D
    nc = max(1, min(nc, kt_total))              # never pad just to feed idle cores
    kt = -(-kt_total // nc)                     # tiles per core
    d_pad = nc * kt * td
    # TODO(synk): for batches so large a full-batch (B, 128) column tile no longer
    # fits VMEM, a two-pass batch-tiled mean would be required; omitted here.

    if d_pad != D:
        pad = ((0, 0), (0, d_pad - D))          # zero columns are exactly neutral
        x1 = jnp.pad(x1, pad)
        x2 = jnp.pad(x2, pad)

    num_chunks = td // _LANES
    kernel = functools.partial(_diff_loss_kernel, num_chunks=num_chunks)

    cost = pl.CostEstimate(
        flops=10 * B * d_pad,
        transcendentals=0,
        bytes_accessed=B * d_pad * (it1 + it2) + nc * 3 * B * _LANES * 4,
    )

    parts = pl.pallas_call(
        kernel,
        out_shape=jax.ShapeDtypeStruct((nc * 3, B, _LANES), jnp.float32),
        grid_spec=pltpu.PrefetchScalarGridSpec(
            num_scalar_prefetch=0,
            grid=(nc, kt),
            in_specs=[
                pl.BlockSpec((B, td), lambda c, k: (0, c * kt + k)),
                pl.BlockSpec((B, td), lambda c, k: (0, c * kt + k)),
            ],
            out_specs=pl.BlockSpec((3, B, _LANES), lambda c, k: (c, 0, 0)),
        ),
        compiler_params=pltpu.CompilerParams(
            dimension_semantics=("parallel", "arbitrary"),
            vmem_limit_bytes=int(vmem_limit),
        ),
        cost_estimate=cost,
    )(x1, x2)

    # Tiny epilogue on B values: combine per-core lane partials, then
    # sqrt / divide / mean with the exact epsilon placement of the reference.
    sums = jnp.sum(parts.reshape(nc, 3, B, _LANES), axis=(0, 3))    # (3, B)
    s11, s22, s12 = sums[0], sums[1], sums[2]
    d = s12 / ((jnp.sqrt(s11) + 1e-6) * (jnp.sqrt(s22) + 1e-6))
    return jnp.mean(d * d)


def diff_loss_ref(x1, x2):
    # Pure-JAX reference mirroring the PyTorch forward exactly.
    x1 = x1.astype(jnp.float32)
    x2 = x2.astype(jnp.float32)
    x1 = x1 - jnp.mean(x1, axis=0, keepdims=True)
    x2 = x2 - jnp.mean(x2, axis=0, keepdims=True)
    n1 = jnp.linalg.norm(x1, ord=2, axis=1, keepdims=True)
    n2 = jnp.linalg.norm(x2, ord=2, axis=1, keepdims=True)
    x1n = x1 / (n1 + 1e-6)
    x2n = x2 / (n2 + 1e-6)
    return jnp.mean(jnp.sum(x1n * x2n, axis=1) ** 2)


if __name__ == "__main__":
    key = jax.random.PRNGKey(0)
    ks = jax.random.split(key, 10)

    def check(a, b, **kw):
        out = diff_loss(a, b, **kw)
        jax.block_until_ready(out)
        ref = diff_loss_ref(a, b)
        assert jnp.allclose(out, ref, atol=1e-5, rtol=1e-5), (out, ref)

    # 1) small (batch=8, hidden=32): exercises feature-axis zero padding.
    check(jax.random.normal(ks[0], (8, 32), jnp.float32),
          jax.random.normal(ks[1], (8, 32), jnp.float32))
    # 2) (16, 384): single-block fast path (whole problem in one (B, D) tile).
    check(jax.random.normal(ks[2], (16, 384), jnp.float32),
          jax.random.normal(ks[3], (16, 384), jnp.float32))
    # 3) same data, tiny tile budget forces td=256 -> 2 streamed feature tiles.
    check(jax.random.normal(ks[2], (16, 384), jnp.float32),
          jax.random.normal(ks[3], (16, 384), jnp.float32),
          vmem_tile_budget_bytes=200 * 1024)
    # 4) forced dual-core split: per-core partial outputs combined in the wrapper
    #    (runs sequentially on 1-TC chips, split across TCs on v7x / megacore).
    check(jax.random.normal(ks[4], (16, 384), jnp.float32),
          jax.random.normal(ks[5], (16, 384), jnp.float32),
          vmem_tile_budget_bytes=200 * 1024, num_cores=2)
    # 5) batch not a multiple of 8 + odd feature count (sublane-padded tail).
    check(jax.random.normal(ks[6], (10, 200), jnp.float32),
          jax.random.normal(ks[7], (10, 200), jnp.float32))
    # 6) bf16 inputs stay narrow through the DMA; f32 accumulation in-kernel.
    check(jax.random.normal(ks[8], (16, 256), jnp.float32).astype(jnp.bfloat16),
          jax.random.normal(ks[9], (16, 256), jnp.float32).astype(jnp.bfloat16))

    print("KERNEL_OK")
</pallas_src>

<mosaic_0001>
module attributes {stable_mosaic.version = 11 : i64} {
  func.func @_diff_loss_kernel(%arg0: i32, %arg1: i32, %arg2: memref<8x128xf32, #tpu.memory_space<vmem>>, %arg3: memref<8x128xf32, #tpu.memory_space<vmem>>, %arg4: memref<3x8x128xf32, #tpu.memory_space<vmem>>) attributes {dimension_semantics = [#tpu.dimension_semantics<parallel>, #tpu.dimension_semantics<arbitrary>], iteration_bounds = array<i64: 1, 1>, scalar_prefetch = 0 : i64, scratch_operands = 0 : i64, tpu.core_type = #tpu.core_type<tc>, window_params = [{transform_indices = @transform_0, window_bounds = array<i64: 8, 128>}, {transform_indices = @transform_1, window_bounds = array<i64: 8, 128>}, {transform_indices = @transform_2, window_bounds = array<i64: 3, 8, 128>}]} {
    %c0_i32 = arith.constant 0 : i32
    %0 = arith.cmpi eq, %arg1, %c0_i32 : i32
    %1 = arith.extui %0 : i1 to i32
    %c0_i32_0 = arith.constant 0 : i32
    %2 = arith.cmpi ne, %1, %c0_i32_0 : i32
    scf.if %2 {
      %cst_26 = arith.constant 0.000000e+00 : f32
      %44 = vector.broadcast %cst_26 : f32 to vector<3x8x128xf32>
      %c0_27 = arith.constant 0 : index
      %c0_28 = arith.constant 0 : index
      %c0_29 = arith.constant 0 : index
      %45 = vector.load %arg4[%c0_27, %c0_28, %c0_29] : memref<3x8x128xf32, #tpu.memory_space<vmem>>, vector<3x8x128xf32>
      tpu.vector_store %arg4[%c0_27, %c0_28, %c0_29], %44 {strides = array<i32>} : memref<3x8x128xf32, #tpu.memory_space<vmem>>, vector<3x8x128xf32>,
    } else {
    }
    %cst = arith.constant 0.000000e+00 : f32
    %3 = vector.broadcast %cst : f32 to vector<8x128xf32>
    %cst_1 = arith.constant 0.000000e+00 : f32
    %4 = vector.broadcast %cst_1 : f32 to vector<8x128xf32>
    %cst_2 = arith.constant 0.000000e+00 : f32
    %5 = vector.broadcast %cst_2 : f32 to vector<8x128xf32>
    %c0 = arith.constant 0 : index
    %c0_3 = arith.constant 0 : index
    %6 = vector.load %arg2[%c0, %c0_3] : memref<8x128xf32, #tpu.memory_space<vmem>>, vector<8x128xf32>
    %c0_4 = arith.constant 0 : index
    %c0_5 = arith.constant 0 : index
    %7 = vector.load %arg3[%c0_4, %c0_5] : memref<8x128xf32, #tpu.memory_space<vmem>>, vector<8x128xf32>
    %cst_6 = arith.constant dense<0.000000e+00> : vector<128xf32>
    %8 = vector.multi_reduction <add>, %6, %cst_6 [0] : vector<8x128xf32> to vector<128xf32>
    %9 = vector.shape_cast %8 : vector<128xf32> to vector<1x128xf32>
    %cst_7 = arith.constant 8.000000e+00 : f32
    %10 = vector.broadcast %cst_7 : f32 to vector<1x128xf32>
    %11 = arith.divf %9, %10 : vector<1x128xf32>
    %12 = vector.broadcast %11 : vector<1x128xf32> to vector<8x128xf32>
    %13 = arith.subf %6, %12 : vector<8x128xf32>
    %cst_8 = arith.constant dense<0.000000e+00> : vector<128xf32>
    %14 = vector.multi_reduction <add>, %7, %cst_8 [0] : vector<8x128xf32> to vector<128xf32>
    %15 = vector.shape_cast %14 : vector<128xf32> to vector<1x128xf32>
    %cst_9 = arith.constant 8.000000e+00 : f32
    %16 = vector.broadcast %cst_9 : f32 to vector<1x128xf32>
    %17 = arith.divf %15, %16 : vector<1x128xf32>
    %18 = vector.broadcast %17 : vector<1x128xf32> to vector<8x128xf32>
    %19 = arith.subf %7, %18 : vector<8x128xf32>
    %20 = arith.mulf %13, %13 : vector<8x128xf32>
    %21 = arith.addf %3, %20 : vector<8x128xf32>
    %22 = arith.mulf %19, %19 : vector<8x128xf32>
    %23 = arith.addf %4, %22 : vector<8x128xf32>
    %24 = arith.mulf %13, %19 : vector<8x128xf32>
    %25 = arith.addf %5, %24 : vector<8x128xf32>
    %c0_10 = arith.constant 0 : index
    %c0_11 = arith.constant 0 : index
    %c0_12 = arith.constant 0 : index
    %26 = vector.load %arg4[%c0_10, %c0_11, %c0_12] : memref<3x8x128xf32, #tpu.memory_space<vmem>>, vector<1x8x128xf32>
    %27 = vector.shape_cast %26 : vector<1x8x128xf32> to vector<8x128xf32>
    %28 = arith.addf %27, %21 : vector<8x128xf32>
    %c0_13 = arith.constant 0 : index
    %c0_14 = arith.constant 0 : index
    %c0_15 = arith.constant 0 : index
    %29 = vector.load %arg4[%c0_13, %c0_14, %c0_15] : memref<3x8x128xf32, #tpu.memory_space<vmem>>, vector<1x8x128xf32>
    %30 = vector.shape_cast %29 : vector<1x8x128xf32> to vector<8x128xf32>
    %31 = vector.shape_cast %28 : vector<8x128xf32> to vector<1x8x128xf32>
    tpu.vector_store %arg4[%c0_13, %c0_14, %c0_15], %31 {strides = array<i32>} : memref<3x8x128xf32, #tpu.memory_space<vmem>>, vector<1x8x128xf32>,
    %c1 = arith.constant 1 : index
    %c0_16 = arith.constant 0 : index
    %c0_17 = arith.constant 0 : index
    %32 = vector.load %arg4[%c1, %c0_16, %c0_17] : memref<3x8x128xf32, #tpu.memory_space<vmem>>, vector<1x8x128xf32>
    %33 = vector.shape_cast %32 : vector<1x8x128xf32> to vector<8x128xf32>
    %34 = arith.addf %33, %23 : vector<8x128xf32>
    %c1_18 = arith.constant 1 : index
    %c0_19 = arith.constant 0 : index
    %c0_20 = arith.constant 0 : index
    %35 = vector.load %arg4[%c1_18, %c0_19, %c0_20] : memref<3x8x128xf32, #tpu.memory_space<vmem>>, vector<1x8x128xf32>
    %36 = vector.shape_cast %35 : vector<1x8x128xf32> to vector<8x128xf32>
    %37 = vector.shape_cast %34 : vector<8x128xf32> to vector<1x8x128xf32>
    tpu.vector_store %arg4[%c1_18, %c0_19, %c0_20], %37 {strides = array<i32>} : memref<3x8x128xf32, #tpu.memory_space<vmem>>, vector<1x8x128xf32>,
    %c2 = arith.constant 2 : index
    %c0_21 = arith.constant 0 : index
    %c0_22 = arith.constant 0 : index
    %38 = vector.load %arg4[%c2, %c0_21, %c0_22] : memref<3x8x128xf32, #tpu.memory_space<vmem>>, vector<1x8x128xf32>
    %39 = vector.shape_cast %38 : vector<1x8x128xf32> to vector<8x128xf32>
    %40 = arith.addf %39, %25 : vector<8x128xf32>
    %c2_23 = arith.constant 2 : index
    %c0_24 = arith.constant 0 : index
    %c0_25 = arith.constant 0 : index
    %41 = vector.load %arg4[%c2_23, %c0_24, %c0_25] : memref<3x8x128xf32, #tpu.memory_space<vmem>>, vector<1x8x128xf32>
    %42 = vector.shape_cast %41 : vector<1x8x128xf32> to vector<8x128xf32>
    %43 = vector.shape_cast %40 : vector<8x128xf32> to vector<1x8x128xf32>
    tpu.vector_store %arg4[%c2_23, %c0_24, %c0_25], %43 {strides = array<i32>} : memref<3x8x128xf32, #tpu.memory_space<vmem>>, vector<1x8x128xf32>,
    return
  }
  func.func @transform_0(%arg0: i32, %arg1: i32) -> (i32, i32) {
    %c1_i32 = arith.constant 1 : i32
    %0 = arith.muli %arg0, %c1_i32 : i32
    %1 = arith.addi %0, %arg1 : i32
    %c0_i32 = arith.constant 0 : i32
    %c0_i32_0 = arith.constant 0 : i32
    return %c0_i32, %1 : i32, i32
  }
  func.func @transform_1(%arg0: i32, %arg1: i32) -> (i32, i32) {
    %c1_i32 = arith.constant 1 : i32
    %0 = arith.muli %arg0, %c1_i32 : i32
    %1 = arith.addi %0, %arg1 : i32
    %c0_i32 = arith.constant 0 : i32
    %c0_i32_0 = arith.constant 0 : i32
    return %c0_i32, %1 : i32, i32
  }
  func.func @transform_2(%arg0: i32, %arg1: i32) -> (i32, i32, i32) {
    %c0_i32 = arith.constant 0 : i32
    %c0_i32_0 = arith.constant 0 : i32
    %c0_i32_1 = arith.constant 0 : i32
    return %arg0, %c0_i32, %c0_i32_0 : i32, i32, i32
  }
}

</mosaic_0001>

<llo_original>
// kernel: tpu_custom_call.1
$region0: #{tpu_custom_call.1}
  #allocation0 [shape = 'u32[]', space=smem, size = 0x4, offset = 0x4, fixed_abs, tag = 'smem constant byte address 0x4 - core index']
  #allocation1 [shape = 'u32[144,128]{1,0:T(1,128)}', space=vmem, size = 0x12000, scoped, tag = 'internal scratch']
  %s0 = inlined_call_operand.hbm [shape: f32[8,128], index: 0, kind: input, shape index: {}]
  %s1 = inlined_call_operand.hbm [shape: f32[8,128], index: 1, kind: input, shape index: {}]
  %s2 = inlined_call_operand.hbm [shape: f32[3,8,128], index: 2, kind: output, shape index: {}]
  %s3 = sld [smem:[#allocation0]]
  $region30: #{tpu_custom_call.1} parent=0
    _
  %s5 = ssub.s32 1, %s3
  %s6 = scalar_select 0, %s5, %s3
  $region1: #{tpu_custom_call.1} parent=0
    #allocation2 [shape = 'u8[4096]{0}', space=vmem, size = 0x1000, scoped, tag = 'input window, operand 0, single buffered']
    #allocation3 [shape = 's32[1]{0}', space=sflag, size = 0x4, scoped, tag = 'scoped memory for tpu_custom_call.1']
    #allocation4 [shape = 's32[1]{0}', space=sflag, size = 0x4, scoped, tag = 'scoped memory for tpu_custom_call.1']
    #allocation5 [shape = 'u8[4096]{0}', space=vmem, size = 0x1000, scoped, tag = 'input window, operand 1, single buffered']
    #allocation6 [shape = 's32[1]{0}', space=sflag, size = 0x4, scoped, tag = 'scoped memory for tpu_custom_call.1']
    #allocation7 [shape = 'u8[12288]{0}', space=vmem, size = 0x3000, scoped, tag = 'output window, operand 0, single buffered']
    %7 = vsyncpa [#allocation3], 0
    %8 = vsyncpa [#allocation6], 0
    %9 = vsyncpa [#allocation4], 0
    // Predicated region
    $region2: #{tpu_custom_call.1} parent=1 // pred_check
      _
    $region3: #{tpu_custom_call.1} parent=1 // pred_check_branch
      %11 = sbr.rel (0) target = $region5
    $region4: #{tpu_custom_call.1} parent=1 // pred_region
      %s12 = sadd.s32 0, 0
      %s14 = ssub.s32 128, 128
      %15 = vsyncadd [#allocation3], %s14
      %s16 = smul.addr %s12, 128
      %s17 = scalar_lea.hbm %s0, %s16
      %s19 = sshll.u32 [#allocation2], 4
      %s20 = int_to_ptr.vmem [resolvable:$true] %s19
      %22 = dma.hbm_to_vmem [thread:$0]  %s17, 128, %s20, [#allocation3]
    $region5: #{tpu_custom_call.1} parent=1 // pred_fallthru
      _
    // Predicated region
    $region6: #{tpu_custom_call.1} parent=1 // pred_check
      _
    $region7: #{tpu_custom_call.1} parent=1 // pred_check_branch
      %24 = sbr.rel (0) target = $region9
    $region8: #{tpu_custom_call.1} parent=1 // pred_region
      %s25 = sadd.s32 0, 0
      %s27 = ssub.s32 128, 128
      %28 = vsyncadd [#allocation6], %s27
      %s29 = smul.addr %s25, 128
      %s30 = scalar_lea.hbm %s1, %s29
      %s32 = sshll.u32 [#allocation5], 4
      %s33 = int_to_ptr.vmem [resolvable:$true] %s32
      %35 = dma.hbm_to_vmem [thread:$0]  %s30, 128, %s33, [#allocation6]
    $region9: #{tpu_custom_call.1} parent=1 // pred_fallthru
      _
    // Predicated region
    $region10: #{tpu_custom_call.1} parent=1 // pred_check
      _
    $region11: #{tpu_custom_call.1} parent=1 // pred_check_branch
      %37 = sbr.rel (0) target = $region13
    $region12: #{tpu_custom_call.1} parent=1 // pred_region
      %38 = dma.done [#allocation3], 128
    $region13: #{tpu_custom_call.1} parent=1 // pred_fallthru
      _
    // Predicated region
    $region14: #{tpu_custom_call.1} parent=1 // pred_check
      _
    $region15: #{tpu_custom_call.1} parent=1 // pred_check_branch
      %40 = sbr.rel (0) target = $region17
    $region16: #{tpu_custom_call.1} parent=1 // pred_region
      %41 = dma.done [#allocation6], 128
    $region17: #{tpu_custom_call.1} parent=1 // pred_fallthru
      _
    %s42 = sadd.s32 0, 0
    %s43 = sadd.s32 0, 0
    %p44 = scmp.eq.s32.totalorder 0, 0
    // Predicated region
    $region18: #{tpu_custom_call.1} parent=1 // pred_check
      %p45 = pneg %p44
    $region19: #{tpu_custom_call.1} parent=1 // pred_check_branch
      %47 = sbr.rel (%p45) target = $region21
    $region20: #{tpu_custom_call.1} parent=1 // pred_region
      %48 = vst [vmem:[#allocation7] sm:$0xff] 0.0
      %49 = vst [vmem:[#allocation7 + $0x8] sm:$0xff] 0.0
      %50 = vst [vmem:[#allocation7 + $0x10] sm:$0xff] 0.0
    $region21: #{tpu_custom_call.1} parent=1 // pred_fallthru
      _
    %v51 = vld [vmem:[#allocation2] sm:$0xff]
    %v52 = vld [vmem:[#allocation5] sm:$0xff]
    %v53 = vrot.slane %v51, 4
    %v54 = vadd.f32 %v51, %v53
    %v55 = vrot.slane %v54, 2
    %v56 = vadd.f32 %v54, %v55
    %v57 = vrot.slane %v56, 1
    %v58 = vadd.f32 %v56, %v57
    %v59 = vrcp.pop 8.0
    %v60 = vmul.f32 %v58, %v59
    %v61 = vsub.f32 %v51, %v60
    %v62 = vrot.slane %v52, 4
    %v63 = vadd.f32 %v52, %v62
    %v64 = vrot.slane %v63, 2
    %v65 = vadd.f32 %v63, %v64
    %v66 = vrot.slane %v65, 1
    %v67 = vadd.f32 %v65, %v66
    %v68 = vmul.f32 %v67, %v59
    %v69 = vsub.f32 %v52, %v68
    %v70 = vmul.f32 %v61, %v61
    %v71 = vadd.f32 %v70, 0.0
    %v72 = vmul.f32 %v69, %v69
    %v73 = vadd.f32 %v72, 0.0
    %v74 = vmul.f32 %v61, %v69
    %v75 = vadd.f32 %v74, 0.0
    %v76 = vld [vmem:[#allocation7] sm:$0xff]
    %v77 = vadd.f32 %v76, %v71
    %78 = vst [vmem:[#allocation7] sm:$0xff] %v77
    %s79 = scalar_lea.vmem [#allocation7], 8
    %v80 = vld [vmem:[%s79] sm:$0xff]
    %v81 = vadd.f32 %v80, %v73
    %82 = vst [vmem:[%s79] sm:$0xff] %v81
    %s83 = scalar_lea.vmem [#allocation7], 16
    %v84 = vld [vmem:[%s83] sm:$0xff]
    %v85 = vadd.f32 %v84, %v75
    %86 = vst [vmem:[%s83] sm:$0xff] %v85
    // Predicated region
    $region22: #{tpu_custom_call.1} parent=1 // pred_check
      _
    $region23: #{tpu_custom_call.1} parent=1 // pred_check_branch
      %88 = sbr.rel (0) target = $region25
    $region24: #{tpu_custom_call.1} parent=1 // pred_region
      %s90 = ssub.s32 384, 384
      %91 = vsyncadd [#allocation4], %s90
      %s92 = sshll.u32 [#allocation7], 4
      %s93 = int_to_ptr.vmem [resolvable:$true] %s92
      %98 = dma.vmem_to_hbm [thread:$0]  %s93, 384, %s2, [#allocation4], 128, 128, 8
    $region25: #{tpu_custom_call.1} parent=1 // pred_fallthru
      _
    // Predicated region
    $region26: #{tpu_custom_call.1} parent=1 // pred_check
      _
    $region27: #{tpu_custom_call.1} parent=1 // pred_check_branch
      %100 = sbr.rel (0) target = $region29
    $region28: #{tpu_custom_call.1} parent=1 // pred_region
      %101 = dma.done [#allocation4], 384
    $region29: #{tpu_custom_call.1} parent=1 // pred_fallthru
      _
    %102 = vsyncpa [#allocation3], 1
    %103 = vsyncpa [#allocation6], 1
    %104 = vsyncpa [#allocation4], 1

</llo_original>
